<compile_context>
chip_gen: v5e
topology: v5e:2x2
jax: 0.10.0
libtpu: 0.0.40
codegen_flags: <defaults>
</compile_context>

<pallas_src>
import functools

import jax
import jax.numpy as jnp
from jax.experimental import pallas as pl
from jax.experimental.pallas import tpu as pltpu

EPS = 1e-5  # nn.GroupNorm default eps


# ------------------------------- fused kernel --------------------------------
def _block_kernel(*refs, H, has_scale_shift):
    if has_scale_shift:
        (x_ref, wband_ref, bias_ref, gamma_ref, beta_ref, pgrp_ref,
         scale_ref, shift_ref, out_ref) = refs
    else:
        (x_ref, wband_ref, bias_ref, gamma_ref, beta_ref, pgrp_ref,
         out_ref) = refs

    xr = x_ref[0]                                     # (H+2, (W+2)*Cin)

    # 3x3 conv == 3 accumulating matmuls over the width-banded weight.
    # Only sublane (H-axis) slicing of the input; the lane axis stays W*Cout.
    acc = jnp.dot(xr[0:H, :], wband_ref[0], preferred_element_type=jnp.float32)
    for dy in (1, 2):
        acc = acc + jnp.dot(xr[dy:dy + H, :], wband_ref[dy],
                            preferred_element_type=jnp.float32)
    acc = acc + bias_ref[...]                         # (1, W*Cout) broadcast

    # GroupNorm: two-pass (mean, then centered variance) to avoid the
    # E[x^2]-E[x]^2 cancellation. Per-group reductions/broadcasts are done with
    # one (W*Cout, W*Cout) averaging matmul so no lane-axis reshapes are needed.
    pgrp = pgrp_ref[...]                              # (W*Cout, W*Cout), /count folded in
    mean_l = jnp.dot(jnp.sum(acc, axis=0, keepdims=True), pgrp,
                     preferred_element_type=jnp.float32)       # (1, W*Cout)
    cen = acc - mean_l
    var_l = jnp.dot(jnp.sum(cen * cen, axis=0, keepdims=True), pgrp,
                    preferred_element_type=jnp.float32)        # (1, W*Cout)
    h = cen * jax.lax.rsqrt(var_l + EPS) * gamma_ref[...] + beta_ref[...]

    if has_scale_shift:
        h = h * (scale_ref[0] + 1.0) + shift_ref[0]

    out_ref[0] = h * jax.nn.sigmoid(h)                # SiLU


# --------------------------------- wrapper ------------------------------------
def block_forward(x_nchw, weight_hwio, bias, gamma, beta, scale_shift=None, *,
                  groups=8, compute_dtype=jnp.float32):
    N, Cin, H, W = x_nchw.shape
    KH, KW, Cin_w, Cout = weight_hwio.shape
    assert (KH, KW, Cin_w) == (3, 3, Cin)
    assert Cout % groups == 0
    G, cpg = groups, Cout // groups
    WC = W * Cout
    f32 = jnp.float32

    # ---- layout plumbing at the boundary (cheap XLA ops on tiny tensors) ----
    x = jnp.transpose(x_nchw, (0, 2, 3, 1)).astype(f32)          # NHWC
    xpad = jnp.pad(x, ((0, 0), (1, 1), (1, 1), (0, 0)))
    xrow = xpad.reshape(N, H + 2, (W + 2) * Cin).astype(compute_dtype)

    # Width-banded conv weight:
    #   wband[dy, wp*Cin+ci, w*Cout+co] = W[dy, wp-w, ci, co]  for wp-w in {0,1,2}
    wp = jnp.arange(W + 2)
    dx = jnp.arange(3)
    wo = jnp.arange(W)
    sel = (wp[:, None, None] == wo[None, None, :] + dx[None, :, None]).astype(f32)
    wband = jnp.einsum("pxw,yxio->ypiwo", sel, weight_hwio.astype(f32))
    wband = wband.reshape(3, (W + 2) * Cin, WC).astype(compute_dtype)

    # Per-lane broadcast tables (lane l = w*Cout + c).
    bias_t = jnp.tile(bias.astype(f32), W).reshape(1, WC)
    gamma_t = jnp.tile(gamma.astype(f32), W).reshape(1, WC)
    beta_t = jnp.tile(beta.astype(f32), W).reshape(1, WC)

    # Group-average matrix: pgrp[l, l'] = 1/(H*W*cpg) if channels of l,l' share
    # a group, else 0  ->  row_sums @ pgrp = per-lane group mean.
    lane_group = (jnp.arange(WC) % Cout) // cpg
    pgrp = (lane_group[:, None] == lane_group[None, :]).astype(f32)
    pgrp = pgrp / float(H * W * cpg)

    has_ss = scale_shift is not None
    args = [xrow, wband, bias_t, gamma_t, beta_t, pgrp]
    in_specs = [
        pl.BlockSpec((1, H + 2, (W + 2) * Cin), lambda n: (n, 0, 0)),
        pl.BlockSpec((3, (W + 2) * Cin, WC), lambda n: (0, 0, 0)),
        pl.BlockSpec((1, WC), lambda n: (0, 0)),
        pl.BlockSpec((1, WC), lambda n: (0, 0)),
        pl.BlockSpec((1, WC), lambda n: (0, 0)),
        pl.BlockSpec((WC, WC), lambda n: (0, 0)),
    ]
    if has_ss:
        scale, shift = scale_shift
        scale_t = jnp.tile(scale.astype(f32).reshape(N, Cout), (1, W)).reshape(N, 1, WC)
        shift_t = jnp.tile(shift.astype(f32).reshape(N, Cout), (1, W)).reshape(N, 1, WC)
        args += [scale_t, shift_t]
        in_specs += [pl.BlockSpec((1, 1, WC), lambda n: (n, 0, 0)),
                     pl.BlockSpec((1, 1, WC), lambda n: (n, 0, 0))]

    kern = functools.partial(_block_kernel, H=H, has_scale_shift=has_ss)

    flops = N * (3 * 2 * H * ((W + 2) * Cin) * WC + 2 * 2 * WC * WC)
    bytes_accessed = sum(int(a.size) * a.dtype.itemsize for a in args) + N * H * WC * 4
    cost = pl.CostEstimate(flops=flops, transcendentals=N * H * WC,
                           bytes_accessed=int(bytes_accessed))

    out = pl.pallas_call(
        kern,
        out_shape=jax.ShapeDtypeStruct((N, H, WC), f32),
        grid=(N,),
        in_specs=in_specs,
        out_specs=pl.BlockSpec((1, H, WC), lambda n: (n, 0, 0)),
        compiler_params=pltpu.CompilerParams(
            dimension_semantics=("parallel",),
            vmem_limit_bytes=32 * 1024 * 1024),
        cost_estimate=cost,
    )(*args)

    out = out.reshape(N, H, W, Cout)
    return jnp.transpose(out, (0, 3, 1, 2))            # back to NCHW


# ----------------------------- pure-JAX reference -----------------------------
def reference(x_nchw, weight_hwio, bias, gamma, beta, scale_shift, groups):
    x = jnp.transpose(x_nchw, (0, 2, 3, 1)).astype(jnp.float32)
    y = jax.lax.conv_general_dilated(
        x, weight_hwio, (1, 1), "SAME",
        dimension_numbers=("NHWC", "HWIO", "NHWC")) + bias.reshape(1, 1, 1, -1)
    N, H, W, C = y.shape
    yg = y.reshape(N, H * W, groups, C // groups)
    mean = yg.mean(axis=(1, 3), keepdims=True)
    var = ((yg - mean) ** 2).mean(axis=(1, 3), keepdims=True)
    yn = ((yg - mean) * jax.lax.rsqrt(var + EPS)).reshape(N, H, W, C)
    yn = yn * gamma.reshape(1, 1, 1, -1) + beta.reshape(1, 1, 1, -1)
    if scale_shift is not None:
        s, sh = scale_shift
        yn = yn * (s[:, None, None, :] + 1.0) + sh[:, None, None, :]
    out = yn * jax.nn.sigmoid(yn)
    return jnp.transpose(out, (0, 3, 1, 2))


if __name__ == "__main__":
    N, Cin, Cout, H, W, groups = 2, 4, 8, 16, 16, 8

    key = jax.random.PRNGKey(0)
    kx, kw, kb, kg, kbe, ks, ksh = jax.random.split(key, 7)
    x = jax.random.normal(kx, (N, Cin, H, W), jnp.float32)
    weight = 0.1 * jax.random.normal(kw, (3, 3, Cin, Cout), jnp.float32)   # HWIO
    bias = 0.1 * jax.random.normal(kb, (Cout,), jnp.float32)
    gamma = 1.0 + 0.05 * jax.random.normal(kg, (Cout,), jnp.float32)
    beta = 0.05 * jax.random.normal(kbe, (Cout,), jnp.float32)
    scale = 0.1 * jax.random.normal(ks, (N, Cout), jnp.float32)
    shift = 0.1 * jax.random.normal(ksh, (N, Cout), jnp.float32)

    fwd = jax.jit(block_forward, static_argnames=("groups", "compute_dtype"))

    # 1) f32 MXU path, with scale_shift (Block as used inside ResnetBlock).
    out = jax.block_until_ready(
        fwd(x, weight, bias, gamma, beta, (scale, shift), groups=groups))
    ref = reference(x, weight, bias, gamma, beta, (scale, shift), groups)
    assert out.shape == (N, Cout, H, W)
    if not jnp.allclose(out, ref, rtol=1e-3, atol=1e-3):
        raise RuntimeError("Pallas output mismatch (f32, with scale_shift)")

    # 2) scale_shift=None path (static flag, no zero tensors streamed in).
    out2 = jax.block_until_ready(
        fwd(x, weight, bias, gamma, beta, None, groups=groups))
    ref2 = reference(x, weight, bias, gamma, beta, None, groups)
    if not jnp.allclose(out2, ref2, rtol=1e-3, atol=1e-3):
        raise RuntimeError("Pallas output mismatch (f32, no scale_shift)")

    # 3) bf16 MXU operands (f32 accumulate / f32 element-wise) for v6e/v7x MXUs.
    out3 = jax.block_until_ready(
        fwd(x, weight, bias, gamma, beta, (scale, shift), groups=groups,
            compute_dtype=jnp.bfloat16))
    if not jnp.allclose(out3, ref, rtol=5e-2, atol=5e-2):
        raise RuntimeError("Pallas output mismatch (bf16 matmul operands)")

    print("KERNEL_OK")
</pallas_src>

<mosaic_0001>
module attributes {stable_mosaic.version = 11 : i64} {
  func.func @_block_kernel(%arg0: i32, %arg1: memref<1x18x72xf32, #tpu.memory_space<vmem>>, %arg2: memref<3x72x128xf32, #tpu.memory_space<vmem>>, %arg3: memref<1x128xf32, #tpu.memory_space<vmem>>, %arg4: memref<1x128xf32, #tpu.memory_space<vmem>>, %arg5: memref<1x128xf32, #tpu.memory_space<vmem>>, %arg6: memref<128x128xf32, #tpu.memory_space<vmem>>, %arg7: memref<1x1x128xf32, #tpu.memory_space<vmem>>, %arg8: memref<1x1x128xf32, #tpu.memory_space<vmem>>, %arg9: memref<1x16x128xf32, #tpu.memory_space<vmem>>) attributes {dimension_semantics = [#tpu.dimension_semantics<parallel>], iteration_bounds = array<i64: 2>, scalar_prefetch = 0 : i64, scratch_operands = 0 : i64, tpu.core_type = #tpu.core_type<tc>, window_params = [{transform_indices = @transform_0, window_bounds = array<i64: 1, 18, 72>}, {pipeline_mode = #tpu.pipeline_mode<synchronous>, transform_indices = @transform_1, window_bounds = array<i64: 3, 72, 128>}, {pipeline_mode = #tpu.pipeline_mode<synchronous>, transform_indices = @transform_2, window_bounds = array<i64: 1, 128>}, {pipeline_mode = #tpu.pipeline_mode<synchronous>, transform_indices = @transform_3, window_bounds = array<i64: 1, 128>}, {pipeline_mode = #tpu.pipeline_mode<synchronous>, transform_indices = @transform_4, window_bounds = array<i64: 1, 128>}, {pipeline_mode = #tpu.pipeline_mode<synchronous>, transform_indices = @transform_5, window_bounds = array<i64: 128, 128>}, {transform_indices = @transform_6, window_bounds = array<i64: 1, 1, 128>}, {transform_indices = @transform_7, window_bounds = array<i64: 1, 1, 128>}, {transform_indices = @transform_8, window_bounds = array<i64: 1, 16, 128>}]} {
    %c0 = arith.constant 0 : index
    %c0_0 = arith.constant 0 : index
    %c0_1 = arith.constant 0 : index
    %0 = vector.load %arg1[%c0, %c0_0, %c0_1] : memref<1x18x72xf32, #tpu.memory_space<vmem>>, vector<1x18x72xf32>
    %1 = vector.shape_cast %0 : vector<1x18x72xf32> to vector<18x72xf32>
    %2 = vector.extract_strided_slice %1 {offsets = [0, 0], sizes = [16, 72], strides = [1, 1]} : vector<18x72xf32> to vector<16x72xf32>
    %c0_2 = arith.constant 0 : index
    %c0_3 = arith.constant 0 : index
    %c0_4 = arith.constant 0 : index
    %3 = vector.load %arg2[%c0_2, %c0_3, %c0_4] : memref<3x72x128xf32, #tpu.memory_space<vmem>>, vector<1x72x128xf32>
    %4 = vector.shape_cast %3 : vector<1x72x128xf32> to vector<72x128xf32>
    %cst = arith.constant dense<0.000000e+00> : vector<16x128xf32>
    %5 = tpu.matmul %2, %4, %cst {dimension_numbers = #tpu.dot_dimension_numbers<[1], [0], [0], [1], [0, 0, 1, 1], [], []>} : vector<16x72xf32>, vector<72x128xf32>, vector<16x128xf32> -> vector<16x128xf32>
    %6 = vector.extract_strided_slice %1 {offsets = [1, 0], sizes = [16, 72], strides = [1, 1]} : vector<18x72xf32> to vector<16x72xf32>
    %c1 = arith.constant 1 : index
    %c0_5 = arith.constant 0 : index
    %c0_6 = arith.constant 0 : index
    %7 = vector.load %arg2[%c1, %c0_5, %c0_6] : memref<3x72x128xf32, #tpu.memory_space<vmem>>, vector<1x72x128xf32>
    %8 = vector.shape_cast %7 : vector<1x72x128xf32> to vector<72x128xf32>
    %cst_7 = arith.constant dense<0.000000e+00> : vector<16x128xf32>
    %9 = tpu.matmul %6, %8, %cst_7 {dimension_numbers = #tpu.dot_dimension_numbers<[1], [0], [0], [1], [0, 0, 1, 1], [], []>} : vector<16x72xf32>, vector<72x128xf32>, vector<16x128xf32> -> vector<16x128xf32>
    %10 = arith.addf %5, %9 : vector<16x128xf32>
    %11 = vector.extract_strided_slice %1 {offsets = [2, 0], sizes = [16, 72], strides = [1, 1]} : vector<18x72xf32> to vector<16x72xf32>
    %c2 = arith.constant 2 : index
    %c0_8 = arith.constant 0 : index
    %c0_9 = arith.constant 0 : index
    %12 = vector.load %arg2[%c2, %c0_8, %c0_9] : memref<3x72x128xf32, #tpu.memory_space<vmem>>, vector<1x72x128xf32>
    %13 = vector.shape_cast %12 : vector<1x72x128xf32> to vector<72x128xf32>
    %cst_10 = arith.constant dense<0.000000e+00> : vector<16x128xf32>
    %14 = tpu.matmul %11, %13, %cst_10 {dimension_numbers = #tpu.dot_dimension_numbers<[1], [0], [0], [1], [0, 0, 1, 1], [], []>} : vector<16x72xf32>, vector<72x128xf32>, vector<16x128xf32> -> vector<16x128xf32>
    %15 = arith.addf %10, %14 : vector<16x128xf32>
    %c0_11 = arith.constant 0 : index
    %c0_12 = arith.constant 0 : index
    %16 = vector.load %arg3[%c0_11, %c0_12] : memref<1x128xf32, #tpu.memory_space<vmem>>, vector<1x128xf32>
    %17 = vector.broadcast %16 : vector<1x128xf32> to vector<16x128xf32>
    %18 = arith.addf %15, %17 : vector<16x128xf32>
    %c0_13 = arith.constant 0 : index
    %c0_14 = arith.constant 0 : index
    %19 = vector.load %arg6[%c0_13, %c0_14] : memref<128x128xf32, #tpu.memory_space<vmem>>, vector<128x128xf32>
    %cst_15 = arith.constant dense<0.000000e+00> : vector<128xf32>
    %20 = vector.multi_reduction <add>, %18, %cst_15 [0] : vector<16x128xf32> to vector<128xf32>
    %21 = vector.shape_cast %20 : vector<128xf32> to vector<1x128xf32>
    %cst_16 = arith.constant dense<0.000000e+00> : vector<1x128xf32>
    %22 = tpu.matmul %21, %19, %cst_16 {dimension_numbers = #tpu.dot_dimension_numbers<[1], [0], [0], [1], [0, 0, 1, 1], [], []>} : vector<1x128xf32>, vector<128x128xf32>, vector<1x128xf32> -> vector<1x128xf32>
    %23 = vector.broadcast %22 : vector<1x128xf32> to vector<16x128xf32>
    %24 = arith.subf %18, %23 : vector<16x128xf32>
    %25 = arith.mulf %24, %24 : vector<16x128xf32>
    %cst_17 = arith.constant dense<0.000000e+00> : vector<128xf32>
    %26 = vector.multi_reduction <add>, %25, %cst_17 [0] : vector<16x128xf32> to vector<128xf32>
    %27 = vector.shape_cast %26 : vector<128xf32> to vector<1x128xf32>
    %cst_18 = arith.constant dense<0.000000e+00> : vector<1x128xf32>
    %28 = tpu.matmul %27, %19, %cst_18 {dimension_numbers = #tpu.dot_dimension_numbers<[1], [0], [0], [1], [0, 0, 1, 1], [], []>} : vector<1x128xf32>, vector<128x128xf32>, vector<1x128xf32> -> vector<1x128xf32>
    %cst_19 = arith.constant 9.99999974E-6 : f32
    %29 = vector.broadcast %cst_19 : f32 to vector<1x128xf32>
    %30 = arith.addf %28, %29 : vector<1x128xf32>
    %31 = math.rsqrt %30 : vector<1x128xf32>
    %32 = vector.broadcast %31 : vector<1x128xf32> to vector<16x128xf32>
    %33 = arith.mulf %24, %32 : vector<16x128xf32>
    %c0_20 = arith.constant 0 : index
    %c0_21 = arith.constant 0 : index
    %34 = vector.load %arg4[%c0_20, %c0_21] : memref<1x128xf32, #tpu.memory_space<vmem>>, vector<1x128xf32>
    %35 = vector.broadcast %34 : vector<1x128xf32> to vector<16x128xf32>
    %36 = arith.mulf %33, %35 : vector<16x128xf32>
    %c0_22 = arith.constant 0 : index
    %c0_23 = arith.constant 0 : index
    %37 = vector.load %arg5[%c0_22, %c0_23] : memref<1x128xf32, #tpu.memory_space<vmem>>, vector<1x128xf32>
    %38 = vector.broadcast %37 : vector<1x128xf32> to vector<16x128xf32>
    %39 = arith.addf %36, %38 : vector<16x128xf32>
    %c0_24 = arith.constant 0 : index
    %c0_25 = arith.constant 0 : index
    %c0_26 = arith.constant 0 : index
    %40 = vector.load %arg7[%c0_24, %c0_25, %c0_26] : memref<1x1x128xf32, #tpu.memory_space<vmem>>, vector<1x1x128xf32>
    %41 = vector.shape_cast %40 : vector<1x1x128xf32> to vector<1x128xf32>
    %cst_27 = arith.constant 1.000000e+00 : f32
    %42 = vector.broadcast %cst_27 : f32 to vector<1x128xf32>
    %43 = arith.addf %41, %42 : vector<1x128xf32>
    %44 = vector.broadcast %43 : vector<1x128xf32> to vector<16x128xf32>
    %45 = arith.mulf %39, %44 : vector<16x128xf32>
    %c0_28 = arith.constant 0 : index
    %c0_29 = arith.constant 0 : index
    %c0_30 = arith.constant 0 : index
    %46 = vector.load %arg8[%c0_28, %c0_29, %c0_30] : memref<1x1x128xf32, #tpu.memory_space<vmem>>, vector<1x1x128xf32>
    %47 = vector.shape_cast %46 : vector<1x1x128xf32> to vector<1x128xf32>
    %48 = vector.broadcast %47 : vector<1x128xf32> to vector<16x128xf32>
    %49 = arith.addf %45, %48 : vector<16x128xf32>
    %50 = arith.negf %49 : vector<16x128xf32>
    %51 = math.exp %50 : vector<16x128xf32>
    %cst_31 = arith.constant 1.000000e+00 : f32
    %52 = vector.broadcast %cst_31 : f32 to vector<16x128xf32>
    %53 = arith.addf %52, %51 : vector<16x128xf32>
    %54 = arith.divf %52, %53 : vector<16x128xf32>
    %55 = arith.mulf %49, %54 : vector<16x128xf32>
    %c0_32 = arith.constant 0 : index
    %c0_33 = arith.constant 0 : index
    %c0_34 = arith.constant 0 : index
    %56 = vector.load %arg9[%c0_32, %c0_33, %c0_34] : memref<1x16x128xf32, #tpu.memory_space<vmem>>, vector<1x16x128xf32>
    %57 = vector.shape_cast %56 : vector<1x16x128xf32> to vector<16x128xf32>
    %58 = vector.shape_cast %55 : vector<16x128xf32> to vector<1x16x128xf32>
    tpu.vector_store %arg9[%c0_32, %c0_33, %c0_34], %58 {strides = array<i32>} : memref<1x16x128xf32, #tpu.memory_space<vmem>>, vector<1x16x128xf32>,
    return
  }
  func.func @transform_0(%arg0: i32) -> (i32, i32, i32) {
    %c0_i32 = arith.constant 0 : i32
    %c0_i32_0 = arith.constant 0 : i32
    %c0_i32_1 = arith.constant 0 : i32
    return %arg0, %c0_i32, %c0_i32_0 : i32, i32, i32
  }
  func.func @transform_1(%arg0: i32) -> (i32, i32, i32) {
    %c0_i32 = arith.constant 0 : i32
    %c0_i32_0 = arith.constant 0 : i32
    %c0_i32_1 = arith.constant 0 : i32
    %c0_i32_2 = arith.constant 0 : i32
    return %c0_i32, %c0_i32_0, %c0_i32_1 : i32, i32, i32
  }
  func.func @transform_2(%arg0: i32) -> (i32, i32) {
    %c0_i32 = arith.constant 0 : i32
    %c0_i32_0 = arith.constant 0 : i32
    %c0_i32_1 = arith.constant 0 : i32
    return %c0_i32, %c0_i32_0 : i32, i32
  }
  func.func @transform_3(%arg0: i32) -> (i32, i32) {
    %c0_i32 = arith.constant 0 : i32
    %c0_i32_0 = arith.constant 0 : i32
    %c0_i32_1 = arith.constant 0 : i32
    return %c0_i32, %c0_i32_0 : i32, i32
  }
  func.func @transform_4(%arg0: i32) -> (i32, i32) {
    %c0_i32 = arith.constant 0 : i32
    %c0_i32_0 = arith.constant 0 : i32
    %c0_i32_1 = arith.constant 0 : i32
    return %c0_i32, %c0_i32_0 : i32, i32
  }
  func.func @transform_5(%arg0: i32) -> (i32, i32) {
    %c0_i32 = arith.constant 0 : i32
    %c0_i32_0 = arith.constant 0 : i32
    %c0_i32_1 = arith.constant 0 : i32
    return %c0_i32, %c0_i32_0 : i32, i32
  }
  func.func @transform_6(%arg0: i32) -> (i32, i32, i32) {
    %c0_i32 = arith.constant 0 : i32
    %c0_i32_0 = arith.constant 0 : i32
    %c0_i32_1 = arith.constant 0 : i32
    return %arg0, %c0_i32, %c0_i32_0 : i32, i32, i32
  }
  func.func @transform_7(%arg0: i32) -> (i32, i32, i32) {
    %c0_i32 = arith.constant 0 : i32
    %c0_i32_0 = arith.constant 0 : i32
    %c0_i32_1 = arith.constant 0 : i32
    return %arg0, %c0_i32, %c0_i32_0 : i32, i32, i32
  }
  func.func @transform_8(%arg0: i32) -> (i32, i32, i32) {
    %c0_i32 = arith.constant 0 : i32
    %c0_i32_0 = arith.constant 0 : i32
    %c0_i32_1 = arith.constant 0 : i32
    return %arg0, %c0_i32, %c0_i32_0 : i32, i32, i32
  }
}

</mosaic_0001>

<llo_original>
// kernel: tile.28
$region0: #{tile.28}
  #allocation0 [shape = 's32[1]{0}', space=sflag, size = 0x4, scoped, tag = 'scoped memory for tile.28']
  %s0 = inlined_call_operand.vmem [shape: f32[8], index: 0, kind: input, shape index: {}]
  %s1 = inlined_call_operand.vmem [shape: f32[16,8], index: 1, kind: output, shape index: {}]
  // Predicated region
  $region2: #{tile.28} parent=0 // pred_check
    _
  $region3: #{tile.28} parent=0 // pred_check_branch
    %3 = sbr.rel (0) target = $region5
  $region4: #{tile.28} parent=0 // pred_region
    _
  $region5: #{tile.28} parent=0 // pred_fallthru
    _
  %v4 = vld [vmem:[%s0] ss:$0 sm:$0xff]
  %5 = vst [vmem:[%s1] sm:$0xff] %v4
  %s6 = scalar_lea.vmem %s1, 8
  %7 = vst [vmem:[%s6] sm:$0xff] %v4

// kernel: tile.29
$region0: #{tile.29}
  %s0 = inlined_call_operand.vmem [shape: f32[16,8], index: 0, kind: input, shape index: {}]
  %s1 = inlined_call_operand.vmem [shape: f32[1,128], index: 1, kind: output, shape index: {}]
  $region1: #{tile.29} parent=0
    #allocation0 [shape = 'u8[4096]{0}', space=vmem, size = 0x1000, scoped, tag = 'scoped mem for output reshape']
    %v2 = vld [vmem:[%s0] sm:$0x1]
    %vm3 = vcmask 64512
    %4 = vst.msk [vmem:[#allocation0] sm:$0x1] %vm3, %v2
    %s5 = scalar_lea.vmem %s0, 15
    %v6 = vld [vmem:[%s5] sm:$0x1]
    %7 = vrot.lane.b32.xlu0 %v6, 120
    %v8 = vpop.permute.xlu0 %7
    %vm9 = vcmask 1048512
    %10 = vst.msk [vmem:[#allocation0] sm:$0x1] %vm9, %v8
    %s11 = scalar_lea.vmem %s0, 14
    %v12 = vld [vmem:[%s11] sm:$0x1]
    %13 = vrot.lane.b32.xlu0 %v12, 112
    %v14 = vpop.permute.xlu0 %13
    %vm15 = vcmask 982912
    %16 = vst.msk [vmem:[#allocation0] sm:$0x1] %vm15, %v14
    %s17 = scalar_lea.vmem %s0, 13
    %v18 = vld [vmem:[%s17] sm:$0x1]
    %19 = vrot.lane.b32.xlu0 %v18, 104
    %v20 = vpop.permute.xlu0 %19
    %vm21 = vcmask 917312
    %22 = vst.msk [vmem:[#allocation0] sm:$0x1] %vm21, %v20
    %s23 = scalar_lea.vmem %s0, 12
    %v24 = vld [vmem:[%s23] sm:$0x1]
    %25 = vrot.lane.b32.xlu0 %v24, 96
    %v26 = vpop.permute.xlu0 %25
    %vm27 = vcmask 851712
    %28 = vst.msk [vmem:[#allocation0] sm:$0x1] %vm27, %v26
    %s29 = scalar_lea.vmem %s0, 11
    %v30 = vld [vmem:[%s29] sm:$0x1]
    %31 = vrot.lane.b32.xlu0 %v30, 88
    %v32 = vpop.permute.xlu0 %31
    %vm33 = vcmask 786112
    %34 = vst.msk [vmem:[#allocation0] sm:$0x1] %vm33, %v32
    %s35 = scalar_lea.vmem %s0, 10
    %v36 = vld [vmem:[%s35] sm:$0x1]
    %37 = vrot.lane.b32.xlu0 %v36, 80
    %v38 = vpop.permute.xlu0 %37
    %vm39 = vcmask 720512
    %40 = vst.msk [vmem:[#allocation0] sm:$0x1] %vm39, %v38
    %s41 = scalar_lea.vmem %s0, 9
    %v42 = vld [vmem:[%s41] sm:$0x1]
    %43 = vrot.lane.b32.xlu0 %v42, 72
    %v44 = vpop.permute.xlu0 %43
    %vm45 = vcmask 654912
    %46 = vst.msk [vmem:[#allocation0] sm:$0x1] %vm45, %v44
    %s47 = scalar_lea.vmem %s0, 8
    %v48 = vld [vmem:[%s47] sm:$0x1]
    %49 = vrot.lane.b32.xlu0 %v48, 64
    %v50 = vpop.permute.xlu0 %49
    %vm51 = vcmask 589312
    %52 = vst.msk [vmem:[#allocation0] sm:$0x1] %vm51, %v50
    %s53 = scalar_lea.vmem %s0, 7
    %v54 = vld [vmem:[%s53] sm:$0x1]
    %55 = vrot.lane.b32.xlu0 %v54, 56
    %v56 = vpop.permute.xlu0 %55
    %vm57 = vcmask 523712
    %58 = vst.msk [vmem:[#allocation0] sm:$0x1] %vm57, %v56
    %s59 = scalar_lea.vmem %s0, 6
    %v60 = vld [vmem:[%s59] sm:$0x1]
    %61 = vrot.lane.b32.xlu0 %v60, 48
    %v62 = vpop.permute.xlu0 %61
    %vm63 = vcmask 458112
    %64 = vst.msk [vmem:[#allocation0] sm:$0x1] %vm63, %v62
    %s65 = scalar_lea.vmem %s0, 5
    %v66 = vld [vmem:[%s65] sm:$0x1]
    %67 = vrot.lane.b32.xlu0 %v66, 40
    %v68 = vpop.permute.xlu0 %67
    %vm69 = vcmask 392512
    %70 = vst.msk [vmem:[#allocation0] sm:$0x1] %vm69, %v68
    %s71 = scalar_lea.vmem %s0, 4
    %v72 = vld [vmem:[%s71] sm:$0x1]
    %73 = vrot.lane.b32.xlu0 %v72, 32
    %v74 = vpop.permute.xlu0 %73
    %vm75 = vcmask 326912
    %76 = vst.msk [vmem:[#allocation0] sm:$0x1] %vm75, %v74
    %s77 = scalar_lea.vmem %s0, 3
    %v78 = vld [vmem:[%s77] sm:$0x1]
    %79 = vrot.lane.b32.xlu0 %v78, 24
    %v80 = vpop.permute.xlu0 %79
    %vm81 = vcmask 261312
    %82 = vst.msk [vmem:[#allocation0] sm:$0x1] %vm81, %v80
    %s83 = scalar_lea.vmem %s0, 2
    %v84 = vld [vmem:[%s83] sm:$0x1]
    %85 = vrot.lane.b32.xlu0 %v84, 16
    %v86 = vpop.permute.xlu0 %85
    %vm87 = vcmask 195712
    %88 = vst.msk [vmem:[#allocation0] sm:$0x1] %vm87, %v86
    %s89 = scalar_lea.vmem %s0, 1
    %v90 = vld [vmem:[%s89] sm:$0x1]
    %91 = vrot.lane.b32.xlu0 %v90, 8
    %v92 = vpop.permute.xlu0 %91
    %vm93 = vcmask 130112
    %94 = vst.msk [vmem:[#allocation0] sm:$0x1] %vm93, %v92
    %s96 = ssub.s32 2, 1
    %v97 = vld [vmem:[#allocation0] sm:%s96]
    %s99 = ssub.s32 2, 1
    %100 = vst [vmem:[%s1] sm:%s99] %v97

// kernel: block_forward.1
$region0: #{block_forward.1}
  #allocation0 [shape = 'u32[]', space=smem, size = 0x4, offset = 0x4, fixed_abs, tag = 'smem constant byte address 0x4 - core index']
  #allocation1 [shape = 'u32[72,128]{1,0:T(1,128)}', space=vmem, size = 0x9000, scoped, tag = 'internal scratch']
  %s0 = inlined_call_operand.vmem [shape: f32[2,18,72], index: 0, kind: input, shape index: {}]
  %s1 = inlined_call_operand.vmem [shape: f32[3,72,128], index: 1, kind: input, shape index: {}]
  %s2 = inlined_call_operand.vmem [shape: f32[1,128], index: 2, kind: input, shape index: {}]
  %s3 = inlined_call_operand.vmem [shape: f32[1,128], index: 3, kind: input, shape index: {}]
  %s4 = inlined_call_operand.vmem [shape: f32[1,128], index: 4, kind: input, shape index: {}]
  %s5 = inlined_call_operand.vmem [shape: f32[128,128], index: 5, kind: input, shape index: {}]
  %s6 = inlined_call_operand.vmem [shape: f32[2,1,128], index: 6, kind: input, shape index: {}]
  %s7 = inlined_call_operand.vmem [shape: f32[2,1,128], index: 7, kind: input, shape index: {}]
  %s8 = inlined_call_operand.vmem [shape: f32[2,16,128], index: 8, kind: output, shape index: {}]
  %s9 = sld [smem:[#allocation0]]
  $region65: #{block_forward.1} parent=0
    _
  %s11 = ssub.s32 1, %s9
  %s12 = scalar_select 0, %s11, %s9
  loop: start=0, step=1, limit=4
  $region2: #{block_forward.1} parent=0 // loop_pre_header
    _
  $region3: #{block_forward.1} parent=0 // loop_header
    %s14 = sphi 0, %s18
    %p15 = scmp.ge.s32.totalorder %s14, 4
    %s24 = sphi 0, %s26
    %s27 = sphi 0, %s24
    %s28 = sphi 0, %s27
    %s44 = sphi 0, %s28
    %s48 = sphi 0, %s48
    %s50 = sphi 0, %s48
    %s51 = sphi 0, %s50
    %s65 = sphi 0, %s51
    %s69 = sphi 0, %s69
    %s71 = sphi 0, %s69
    %s72 = sphi 0, %s71
    %s86 = sphi 0, %s72
    %s90 = sphi 0, %s90
    %s92 = sphi 0, %s90
    %s93 = sphi 0, %s92
    %s107 = sphi 0, %s93
    %s111 = sphi 0, %s111
    %s113 = sphi 0, %s111
    %s114 = sphi 0, %s113
    %s128 = sphi 0, %s114
    %s132 = sphi 0, %s132
    %s134 = sphi 0, %s132
    %s135 = sphi 0, %s134
    %s149 = sphi 0, %s135
    %s155 = sphi 0, %s157
    %s158 = sphi 0, %s155
    %s159 = sphi 0, %s158
    %s175 = sphi 0, %s159
    %s181 = sphi 0, %s183
    %s184 = sphi 0, %s181
    %s185 = sphi 0, %s184
    %s201 = sphi 0, %s185
    %s207 = sphi 0, %s209
    %s210 = sphi 0, %s207
    %s211 = sphi 0, %s210
    %s227 = sphi 0, %s211
  $region4: #{block_forward.1} parent=0 // loop_header_branch
    %17 = sbr.rel (%p15) target = $region8
  $region5: #{block_forward.1} parent=0 // loop_body
    %s19 = ssub.s32 %s14, 1
    %s20 = ssub.s32 %s14, 2
    %s21 = sadd.s32 %s14, 1
    %s22 = ssub.s32 %s14, %s21
    %p23 = scmp.eq.s32.totalorder %s22, 0
    %s25 = sadd.s32 %s24, 1
    %s26 = scalar_select %p23, %s24, %s25
    %p29 = pneg %p23
    %p30 = scmp.eq.s32.totalorder %s14, 1
    %p31 = por %p29, %p30
    %p32 = scmp.ne.s32.totalorder %s24, %s27
    %p33 = scmp.eq.s32.totalorder %s14, 0
    %p34 = por %p32, %p33
    %p35 = scmp.ne.s32.totalorder %s24, %s27
    %p36 = scmp.eq.s32.totalorder %s19, 1
    %p37 = por %p35, %p36
    %p38 = scmp.ne.s32.totalorder %s27, %s28
    %p39 = scmp.eq.s32.totalorder %s19, 0
    %p40 = por %p38, %p39
    %p41 = scmp.ne.s32.totalorder %s27, %s28
    %p42 = scmp.eq.s32.totalorder %s20, 1
    %p43 = por %p41, %p42
    %p45 = scmp.ne.s32.totalorder %s28, %s44
    %p46 = scmp.eq.s32.totalorder %s20, 0
    %p47 = por %p45, %p46
    %s49 = sadd.s32 %s48, 1
    %p52 = scmp.eq.s32.totalorder %s14, 1
    %p53 = scmp.ne.s32.totalorder %s48, %s50
    %p54 = scmp.eq.s32.totalorder %s14, 0
    %p55 = por %p53, %p54
    %p56 = scmp.ne.s32.totalorder %s48, %s50
    %p57 = scmp.eq.s32.totalorder %s19, 1
    %p58 = por %p56, %p57
    %p59 = scmp.ne.s32.totalorder %s50, %s51
    %p60 = scmp.eq.s32.totalorder %s19, 0
    %p61 = por %p59, %p60
    %p62 = scmp.ne.s32.totalorder %s50, %s51
    %p63 = scmp.eq.s32.totalorder %s20, 1
    %p64 = por %p62, %p63
    %p66 = scmp.ne.s32.totalorder %s51, %s65
    %p67 = scmp.eq.s32.totalorder %s20, 0
    %p68 = por %p66, %p67
    %s70 = sadd.s32 %s69, 1
    %p73 = scmp.eq.s32.totalorder %s14, 1
    %p74 = scmp.ne.s32.totalorder %s69, %s71
    %p75 = scmp.eq.s32.totalorder %s14, 0
    %p76 = por %p74, %p75
    %p77 = scmp.ne.s32.totalorder %s69, %s71
    %p78 = scmp.eq.s32.totalorder %s19, 1
    %p79 = por %p77, %p78
    %p80 = scmp.ne.s32.totalorder %s71, %s72
    %p81 = scmp.eq.s32.totalorder %s19, 0
    %p82 = por %p80, %p81
    %p83 = scmp.ne.s32.totalorder %s71, %s72
    %p84 = scmp.eq.s32.totalorder %s20, 1
    %p85 = por %p83, %p84
    %p87 = scmp.ne.s32.totalorder %s72, %s86
    %p88 = scmp.eq.s32.totalorder %s20, 0
    %p89 = por %p87, %p88
    %s91 = sadd.s32 %s90, 1
    %p94 = scmp.eq.s32.totalorder %s14, 1
    %p95 = scmp.ne.s32.totalorder %s90, %s92
    %p96 = scmp.eq.s32.totalorder %s14, 0
    %p97 = por %p95, %p96
    %p98 = scmp.ne.s32.totalorder %s90, %s92
    %p99 = scmp.eq.s32.totalorder %s19, 1
    %p100 = por %p98, %p99
    %p101 = scmp.ne.s32.totalorder %s92, %s93
    %p102 = scmp.eq.s32.totalorder %s19, 0
    %p103 = por %p101, %p102
    %p104 = scmp.ne.s32.totalorder %s92, %s93
    %p105 = scmp.eq.s32.totalorder %s20, 1
    %p106 = por %p104, %p105
    %p108 = scmp.ne.s32.totalorder %s93, %s107
    %p109 = scmp.eq.s32.totalorder %s20, 0
    %p110 = por %p108, %p109
    %s112 = sadd.s32 %s111, 1
    %p115 = scmp.eq.s32.totalorder %s14, 1
    %p116 = scmp.ne.s32.totalorder %s111, %s113
    %p117 = scmp.eq.s32.totalorder %s14, 0
    %p118 = por %p116, %p117
    %p119 = scmp.ne.s32.totalorder %s111, %s113
    %p120 = scmp.eq.s32.totalorder %s19, 1
    %p121 = por %p119, %p120
    %p122 = scmp.ne.s32.totalorder %s113, %s114
    %p123 = scmp.eq.s32.totalorder %s19, 0
    %p124 = por %p122, %p123
    %p125 = scmp.ne.s32.totalorder %s113, %s114
    %p126 = scmp.eq.s32.totalorder %s20, 1
    %p127 = por %p125, %p126
    %p129 = scmp.ne.s32.totalorder %s114, %s128
    %p130 = scmp.eq.s32.totalorder %s20, 0
    %p131 = por %p129, %p130
    %s133 = sadd.s32 %s132, 1
    %p136 = scmp.eq.s32.totalorder %s14, 1
    %p137 = scmp.ne.s32.totalorder %s132, %s134
    %p138 = scmp.eq.s32.totalorder %s14, 0
    %p139 = por %p137, %p138
    %p140 = scmp.ne.s32.totalorder %s132, %s134
    %p141 = scmp.eq.s32.totalorder %s19, 1
    %p142 = por %p140, %p141
    %p143 = scmp.ne.s32.totalorder %s134, %s135
    %p144 = scmp.eq.s32.totalorder %s19, 0
    %p145 = por %p143, %p144
    %p146 = scmp.ne.s32.totalorder %s134, %s135
    %p147 = scmp.eq.s32.totalorder %s20, 1
    %p148 = por %p146, %p147
    %p150 = scmp.ne.s32.totalorder %s135, %s149
    %p151 = scmp.eq.s32.totalorder %s20, 0
    %p152 = por %p150, %p151
    %s153 = ssub.s32 %s14, %s21
    %p154 = scmp.eq.s32.totalorder %s153, 0
    %s156 = sadd.s32 %s155, 1
    %s157 = scalar_select %p154, %s155, %s156
    %p160 = pneg %p154
    %p161 = scmp.eq.s32.totalorder %s14, 1
    %p162 = por %p160, %p161
    %p163 = scmp.ne.s32.totalorder %s155, %s158
    %p164 = scmp.eq.s32.totalorder %s14, 0
    %p165 = por %p163, %p164
    %p166 = scmp.ne.s32.totalorder %s155, %s158
    %p167 = scmp.eq.s32.totalorder %s19, 1
    %p168 = por %p166, %p167
    %p169 = scmp.ne.s32.totalorder %s158, %s159
    %p170 = scmp.eq.s32.totalorder %s19, 0
    %p171 = por %p169, %p170
    %p172 = scmp.ne.s32.totalorder %s158, %s159
    %p173 = scmp.eq.s32.totalorder %s20, 1
    %p174 = por %p172, %p173
    %p176 = scmp.ne.s32.totalorder %s159, %s175
    %p177 = scmp.eq.s32.totalorder %s20, 0
    %p178 = por %p176, %p177
    %s179 = ssub.s32 %s14, %s21
    %p180 = scmp.eq.s32.totalorder %s179, 0
    %s182 = sadd.s32 %s181, 1
    %s183 = scalar_select %p180, %s181, %s182
    %p186 = pneg %p180
    %p187 = scmp.eq.s32.totalorder %s14, 1
    %p188 = por %p186, %p187
    %p189 = scmp.ne.s32.totalorder %s181, %s184
    %p190 = scmp.eq.s32.totalorder %s14, 0
    %p191 = por %p189, %p190
    %p192 = scmp.ne.s32.totalorder %s181, %s184
    %p193 = scmp.eq.s32.totalorder %s19, 1
    %p194 = por %p192, %p193
    %p195 = scmp.ne.s32.totalorder %s184, %s185
    %p196 = scmp.eq.s32.totalorder %s19, 0
    %p197 = por %p195, %p196
    %p198 = scmp.ne.s32.totalorder %s184, %s185
    %p199 = scmp.eq.s32.totalorder %s20, 1
    %p200 = por %p198, %p199
    %p202 = scmp.ne.s32.totalorder %s185, %s201
    %p203 = scmp.eq.s32.totalorder %s20, 0
    %p204 = por %p202, %p203
    %s205 = ssub.s32 %s14, %s21
    %p206 = scmp.eq.s32.totalorder %s205, 0
    %s208 = sadd.s32 %s207, 1
    %s209 = scalar_select %p206, %s207, %s208
    %p212 = pneg %p206
    %p213 = scmp.eq.s32.totalorder %s14, 1
    %p214 = por %p212, %p213
    %p215 = scmp.ne.s32.totalorder %s207, %s210
    %p216 = scmp.eq.s32.totalorder %s14, 0
    %p217 = por %p215, %p216
    %p218 = scmp.ne.s32.totalorder %s207, %s210
    %p219 = scmp.eq.s32.totalorder %s19, 1
    %p220 = por %p218, %p219
    %p221 = scmp.ne.s32.totalorder %s210, %s211
    %p222 = scmp.eq.s32.totalorder %s19, 0
    %p223 = por %p221, %p222
    %p224 = scmp.ne.s32.totalorder %s210, %s211
    %p225 = scmp.eq.s32.totalorder %s20, 1
    %p226 = por %p224, %p225
    %p228 = scmp.ne.s32.totalorder %s211, %s227
    %p229 = scmp.eq.s32.totalorder %s20, 0
    %p230 = por %p228, %p229
    %p231 = scmp.le.s32.totalorder 1, %s14
    %p232 = scmp.lt.s32.totalorder %s14, 3
    %p233 = pnand %p231, %p232
    %p234 = pneg %p233
    // Predicated region
    $region9: #{block_forward.1} parent=5 // pred_check
      _
    $region10: #{block_forward.1} parent=5 // pred_check_branch
      %236 = sbr.rel (%p233) target = $region12
    $region11: #{block_forward.1} parent=5 // pred_region
      %s237 = ssub.s32 %s14, 1
      // Predicated region
      $region13: #{block_forward.1} parent=11 // pred_check
        %p238 = pneg %p61
      $region14: #{block_forward.1} parent=11 // pred_check_branch
        %240 = sbr.rel (%p238) target = $region16
      $region15: #{block_forward.1} parent=11 // pred_region
        _
      $region16: #{block_forward.1} parent=11 // pred_fallthru
        _
      // Predicated region
      $region17: #{block_forward.1} parent=11 // pred_check
        %p241 = pneg %p82
      $region18: #{block_forward.1} parent=11 // pred_check_branch
        %243 = sbr.rel (%p241) target = $region20
      $region19: #{block_forward.1} parent=11 // pred_region
        _
      $region20: #{block_forward.1} parent=11 // pred_fallthru
        _
      // Predicated region
      $region21: #{block_forward.1} parent=11 // pred_check
        %p244 = pneg %p103
      $region22: #{block_forward.1} parent=11 // pred_check_branch
        %246 = sbr.rel (%p244) target = $region24
      $region23: #{block_forward.1} parent=11 // pred_region
        _
      $region24: #{block_forward.1} parent=11 // pred_fallthru
        _
      // Predicated region
      $region25: #{block_forward.1} parent=11 // pred_check
        %p247 = pneg %p124
      $region26: #{block_forward.1} parent=11 // pred_check_branch
        %249 = sbr.rel (%p247) target = $region28
      $region27: #{block_forward.1} parent=11 // pred_region
        _
      $region28: #{block_forward.1} parent=11 // pred_fallthru
        _
      // Predicated region
      $region29: #{block_forward.1} parent=11 // pred_check
        %p250 = pneg %p145
      $region30: #{block_forward.1} parent=11 // pred_check_branch
        %252 = sbr.rel (%p250) target = $region32
      $region31: #{block_forward.1} parent=11 // pred_region
        _
      $region32: #{block_forward.1} parent=11 // pred_fallthru
        _
    $region12: #{block_forward.1} parent=5 // pred_fallthru
      _
    %p253 = scmp.lt.s32.totalorder %s14, 2
    // Predicated region
    $region33: #{block_forward.1} parent=5 // pred_check
      %p254 = pneg %p253
    $region34: #{block_forward.1} parent=5 // pred_check_branch
      %256 = sbr.rel (%p254) target = $region36
    $region35: #{block_forward.1} parent=5 // pred_region
      // Predicated region
      $region37: #{block_forward.1} parent=35 // pred_check
        %p257 = pneg %p34
      $region38: #{block_forward.1} parent=35 // pred_check_branch
        %259 = sbr.rel (%p257) target = $region40
      $region39: #{block_forward.1} parent=35 // pred_region
        %p260 = scmp.lt.s32.totalorder %s14, 1
        %s261 = scalar_select %p260, %s14, 1
        %s262 = smul.addr %s261, 3
        %s263 = smul.addr %s262, 8
        %s264 = scalar_lea.vmem %s0, %s263
      $region40: #{block_forward.1} parent=35 // pred_fallthru
        _
      // Predicated region
      $region41: #{block_forward.1} parent=35 // pred_check
        %p265 = pneg %p165
      $region42: #{block_forward.1} parent=35 // pred_check_branch
        %267 = sbr.rel (%p265) target = $region44
      $region43: #{block_forward.1} parent=35 // pred_region
        %p268 = scmp.lt.s32.totalorder %s14, 1
        %s269 = scalar_select %p268, %s14, 1
        %s270 = scalar_lea.vmem %s6, %s269
      $region44: #{block_forward.1} parent=35 // pred_fallthru
        _
      // Predicated region
      $region45: #{block_forward.1} parent=35 // pred_check
        %p271 = pneg %p191
      $region46: #{block_forward.1} parent=35 // pred_check_branch
        %273 = sbr.rel (%p271) target = $region48
      $region47: #{block_forward.1} parent=35 // pred_region
        %p274 = scmp.lt.s32.totalorder %s14, 1
        %s275 = scalar_select %p274, %s14, 1
        %s276 = scalar_lea.vmem %s7, %s275
      $region48: #{block_forward.1} parent=35 // pred_fallthru
        _
    $region36: #{block_forward.1} parent=5 // pred_fallthru
      _
    %p277 = scmp.le.s32.totalorder 1, %s14
    %p278 = scmp.lt.s32.totalorder %s14, 3
    %p279 = pnand %p277, %p278
    %p280 = pneg %p279
    // Predicated region
    $region49: #{block_forward.1} parent=5 // pred_check
      _
    $region50: #{block_forward.1} parent=5 // pred_check_branch
      %282 = sbr.rel (%p279) target = $region52
    $region51: #{block_forward.1} parent=5 // pred_region
      %s283 = ssub.s32 %s14, 1
      %p284 = scmp.lt.s32.totalorder %s19, 1
      %s285 = scalar_select %p284, %s19, 1
      %s286 = smul.addr %s285, 3
      %s287 = smul.addr %s286, 8
      %s288 = scalar_lea.vmem %s0, %s287
      %p289 = pneg %p40
      %p290 = pneg %p37
      %p291 = pneg %p61
      %p292 = pneg %p58
      %p293 = pneg %p82
      %p294 = pneg %p79
      %p295 = pneg %p103
      %p296 = pneg %p100
      %p297 = pneg %p124
      %p298 = pneg %p121
      %p299 = pneg %p145
      %p300 = pneg %p142
      %p301 = scmp.lt.s32.totalorder %s19, 1
      %s302 = scalar_select %p301, %s19, 1
      %s303 = scalar_lea.vmem %s6, %s302
      %p304 = pneg %p171
      %p305 = pneg %p168
      %p306 = scmp.lt.s32.totalorder %s19, 1
      %s307 = scalar_select %p306, %s19, 1
      %s308 = scalar_lea.vmem %s7, %s307
      %p309 = pneg %p197
      %p310 = pneg %p194
      %p311 = pneg %p223
      %p312 = pneg %p220
      %p313 = scmp.lt.s32.totalorder %s19, 1
      %s314 = scalar_select %p313, %s19, 1
      %s315 = smul.addr %s314, 2
      %s316 = smul.addr %s315, 8
      %s317 = scalar_lea.vmem %s8, %s316
      %p318 = scmp.lt.s32.totalorder %s19, 1
      %s319 = scalar_select %p318, %s19, 1
      %s320 = smul.addr %s319, 3
      %s321 = smul.addr %s320, 8
      %s322 = scalar_lea.vmem %s0, %s321
      %p323 = scmp.lt.s32.totalorder %s19, 1
      %s324 = scalar_select %p323, %s19, 1
      %s325 = scalar_lea.vmem %s6, %s324
      %p326 = scmp.lt.s32.totalorder %s19, 1
      %s327 = scalar_select %p326, %s19, 1
      %s328 = scalar_lea.vmem %s7, %s327
      %p329 = scmp.lt.s32.totalorder %s19, 1
      %s330 = scalar_select %p329, %s19, 1
      %s331 = smul.addr %s330, 2
      %s332 = smul.addr %s331, 8
      %s333 = scalar_lea.vmem %s8, %s332
      %v334 = vld [vmem:[%s322] sm:$0xff]
      %v335 = vld [vmem:[%s322 + $0x8] sm:$0xff]
      %v336 = vld [vmem:[%s322 + $0x10] sm:$0x3]
      %v337 = vld [vmem:[%s1] sm:$0xff]
      %v338 = vld [vmem:[%s1 + $0x8] sm:$0xff]
      %v339 = vld [vmem:[%s1 + $0x10] sm:$0xff]
      %v340 = vld [vmem:[%s1 + $0x18] sm:$0xff]
      %v341 = vld [vmem:[%s1 + $0x20] sm:$0xff]
      %v342 = vld [vmem:[%s1 + $0x28] sm:$0xff]
      %v343 = vld [vmem:[%s1 + $0x30] sm:$0xff]
      %v344 = vld [vmem:[%s1 + $0x38] sm:$0xff]
      %v345 = vld [vmem:[%s1 + $0x40] sm:$0xff]
      %s346 = scalar_lea.vmem %s1, 72
      %v347 = vld [vmem:[%s346] sm:$0xff]
      %v348 = vld [vmem:[%s346 + $0x8] sm:$0xff]
      %v349 = vld [vmem:[%s346 + $0x10] sm:$0xff]
      %v350 = vld [vmem:[%s346 + $0x18] sm:$0xff]
      %v351 = vld [vmem:[%s346 + $0x20] sm:$0xff]
      %v352 = vld [vmem:[%s346 + $0x28] sm:$0xff]
      %v353 = vld [vmem:[%s346 + $0x30] sm:$0xff]
      %v354 = vld [vmem:[%s346 + $0x38] sm:$0xff]
      %v355 = vld [vmem:[%s346 + $0x40] sm:$0xff]
      %vm359 = vcmask 1046528
      %v360 = vrot.slane %v334, 1
      %v361 = vrot.slane %v335, 1
      %v362 = vsel %vm359, %v360, %v361
      %v363 = vrot.slane %v336, 1
      %v364 = vsel %vm359, %v361, %v363
      %vm365 = vcmask 588800
      %v366 = vsel %vm365, %v362, 0
      %v368 = vsel %vm365, %v364, 0
      %370 = vmatpush.msra.mxu0 0.0
      %371 = vmatpush.msra.mxu0 0.0
      %372 = vmatpush.msra.mxu0 0.0
      %373 = vmatpush.msra.mxu0 0.0
      %374 = vmatpush.msra.mxu0 0.0
      %375 = vmatpush.msra.mxu0 0.0
      %376 = vmatpush.msra.mxu0 0.0
      %377 = vmatpush.msra.mxu0 %v355
      %378 = vmatpush.msra.mxu0 %v354
      %379 = vmatpush.msra.mxu0 %v353
      %380 = vmatpush.msra.mxu0 %v352
      %381 = vmatpush.msra.mxu0 %v351
      %382 = vmatpush.msra.mxu0 %v350
      %383 = vmatpush.msra.mxu0 %v349
      %384 = vmatpush.msra.mxu0 %v348
      %385 = vmatpush.msra.mxu0 %v347
      %386 = vmatmul.f32.gmra.mxu0 %v366
      %v387 = vpop.f32.mrf.mxu0
      %v388 = vadd.f32 0.0, %v387
      %389 = vmatmul.f32.gmra.mxu0 %v368
      %v390 = vpop.f32.mrf.mxu0
      %v391 = vadd.f32 0.0, %v390
      %392 = vdwg.mxu0
      %v393 = vsel %vm365, %v334, 0
      %v395 = vsel %vm365, %v335, 0
      %397 = vmatpush.msra.mxu0 0.0
      %398 = vmatpush.msra.mxu0 0.0
      %399 = vmatpush.msra.mxu0 0.0
      %400 = vmatpush.msra.mxu0 0.0
      %401 = vmatpush.msra.mxu0 0.0
      %402 = vmatpush.msra.mxu0 0.0
      %403 = vmatpush.msra.mxu0 0.0
      %404 = vmatpush.msra.mxu0 %v345
      %405 = vmatpush.msra.mxu0 %v344
      %406 = vmatpush.msra.mxu0 %v343
      %407 = vmatpush.msra.mxu0 %v342
      %408 = vmatpush.msra.mxu0 %v341
      %409 = vmatpush.msra.mxu0 %v340
      %410 = vmatpush.msra.mxu0 %v339
      %411 = vmatpush.msra.mxu0 %v338
      %412 = vmatpush.msra.mxu0 %v337
      %413 = vmatmul.f32.gmra.mxu0 %v393
      %v414 = vpop.f32.mrf.mxu0
      %v415 = vadd.f32 %v388, %v414
      %416 = vmatmul.f32.gmra.mxu0 %v395
      %v417 = vpop.f32.mrf.mxu0
      %v418 = vadd.f32 %v391, %v417
      %419 = vdwg.mxu0
      %s420 = scalar_lea.vmem %s1, 144
      %v421 = vld [vmem:[%s420] sm:$0xff]
      %v422 = vld [vmem:[%s420 + $0x8] sm:$0xff]
      %v423 = vld [vmem:[%s420 + $0x10] sm:$0xff]
      %v424 = vld [vmem:[%s420 + $0x18] sm:$0xff]
      %v425 = vld [vmem:[%s420 + $0x20] sm:$0xff]
      %v426 = vld [vmem:[%s420 + $0x28] sm:$0xff]
      %v427 = vld [vmem:[%s420 + $0x30] sm:$0xff]
      %v428 = vld [vmem:[%s420 + $0x38] sm:$0xff]
      %v429 = vld [vmem:[%s420 + $0x40] sm:$0xff]
      %vm430 = vcmask 1045504
      %v431 = vrot.slane %v334, 2
      %v432 = vrot.slane %v335, 2
      %v433 = vsel %vm430, %v431, %v432
      %v434 = vrot.slane %v336, 2
      %v435 = vsel %vm430, %v432, %v434
      %v436 = vsel %vm365, %v433, 0
      %v438 = vsel %vm365, %v435, 0
      %440 = vmatpush.msra.mxu0 0.0
      %441 = vmatpush.msra.mxu0 0.0
      %442 = vmatpush.msra.mxu0 0.0
      %443 = vmatpush.msra.mxu0 0.0
      %444 = vmatpush.msra.mxu0 0.0
      %445 = vmatpush.msra.mxu0 0.0
      %446 = vmatpush.msra.mxu0 0.0
      %447 = vmatpush.msra.mxu0 %v429
      %448 = vmatpush.msra.mxu0 %v428
      %449 = vmatpush.msra.mxu0 %v427
      %450 = vmatpush.msra.mxu0 %v426
      %451 = vmatpush.msra.mxu0 %v425
      %452 = vmatpush.msra.mxu0 %v424
      %453 = vmatpush.msra.mxu0 %v423
      %454 = vmatpush.msra.mxu0 %v422
      %455 = vmatpush.msra.mxu0 %v421
      %456 = vmatmul.f32.gmra.mxu0 %v436
      %v457 = vpop.f32.mrf.mxu0
      %v458 = vadd.f32 0.0, %v457
      %459 = vmatmul.f32.gmra.mxu0 %v438
      %v460 = vpop.f32.mrf.mxu0
      %v461 = vadd.f32 0.0, %v460
      %462 = vdwg.mxu0
      %v463 = vadd.f32 %v415, %v458
      %v464 = vadd.f32 %v418, %v461
      %v465 = vld [vmem:[%s2] sm:$0x1]
      %v467 = vperm.slane %v465, 0
      %v469 = vadd.f32 %v463, %v467
      %v470 = vadd.f32 %v464, %v467
      %v471 = vld [vmem:[%s5] sm:$0xff]
      %v472 = vld [vmem:[%s5 + $0x8] sm:$0xff]
      %v473 = vld [vmem:[%s5 + $0x10] sm:$0xff]
      %v474 = vld [vmem:[%s5 + $0x18] sm:$0xff]
      %v475 = vld [vmem:[%s5 + $0x20] sm:$0xff]
      %v476 = vld [vmem:[%s5 + $0x28] sm:$0xff]
      %v477 = vld [vmem:[%s5 + $0x30] sm:$0xff]
      %v478 = vld [vmem:[%s5 + $0x38] sm:$0xff]
      %v479 = vld [vmem:[%s5 + $0x40] sm:$0xff]
      %v480 = vld [vmem:[%s5 + $0x48] sm:$0xff]
      %v481 = vld [vmem:[%s5 + $0x50] sm:$0xff]
      %v482 = vld [vmem:[%s5 + $0x58] sm:$0xff]
      %v483 = vld [vmem:[%s5 + $0x60] sm:$0xff]
      %v484 = vld [vmem:[%s5 + $0x68] sm:$0xff]
      %v485 = vld [vmem:[%s5 + $0x70] sm:$0xff]
      %v486 = vld [vmem:[%s5 + $0x78] sm:$0xff]
      %v487 = vadd.f32 %v469, %v470
      %v488 = vrot.slane %v487, 4
      %v489 = vadd.f32 %v487, %v488
      %v490 = vrot.slane %v489, 2
      %v491 = vadd.f32 %v489, %v490
      %v492 = vrot.slane %v491, 1
      %v493 = vadd.f32 %v491, %v492
      %494 = vmatpush.msra.mxu0 %v486
      %495 = vmatpush.msra.mxu0 %v485
      %496 = vmatpush.msra.mxu0 %v484
      %497 = vmatpush.msra.mxu0 %v483
      %498 = vmatpush.msra.mxu0 %v482
      %499 = vmatpush.msra.mxu0 %v481
      %500 = vmatpush.msra.mxu0 %v480
      %501 = vmatpush.msra.mxu0 %v479
      %502 = vmatpush.msra.mxu0 %v478
      %503 = vmatpush.msra.mxu0 %v477
      %504 = vmatpush.msra.mxu0 %v476
      %505 = vmatpush.msra.mxu0 %v475
      %506 = vmatpush.msra.mxu0 %v474
      %507 = vmatpush.msra.mxu0 %v473
      %508 = vmatpush.msra.mxu0 %v472
      %509 = vmatpush.msra.mxu0 %v471
      %510 = vmatmul.f32.gmra.mxu0 %v493
      %v511 = vpop.f32.mrf.mxu0
      %v512 = vadd.f32 0.0, %v511
      %513 = vdwg.mxu0
      %v514 = vperm.slane %v512, 0
      %v515 = vsub.f32 %v469, %v514
      %v516 = vsub.f32 %v470, %v514
      %v517 = vmul.f32 %v515, %v515
      %v518 = vmul.f32 %v516, %v516
      %v519 = vadd.f32 %v517, %v518
      %v520 = vrot.slane %v519, 4
      %v521 = vadd.f32 %v519, %v520
      %v522 = vrot.slane %v521, 2
      %v523 = vadd.f32 %v521, %v522
      %v524 = vrot.slane %v523, 1
      %v525 = vadd.f32 %v523, %v524
      %526 = vmatpush.msra.mxu0 %v486
      %527 = vmatpush.msra.mxu0 %v485
      %528 = vmatpush.msra.mxu0 %v484
      %529 = vmatpush.msra.mxu0 %v483
      %530 = vmatpush.msra.mxu0 %v482
      %531 = vmatpush.msra.mxu0 %v481
      %532 = vmatpush.msra.mxu0 %v480
      %533 = vmatpush.msra.mxu0 %v479
      %534 = vmatpush.msra.mxu0 %v478
      %535 = vmatpush.msra.mxu0 %v477
      %536 = vmatpush.msra.mxu0 %v476
      %537 = vmatpush.msra.mxu0 %v475
      %538 = vmatpush.msra.mxu0 %v474
      %539 = vmatpush.msra.mxu0 %v473
      %540 = vmatpush.msra.mxu0 %v472
      %541 = vmatpush.msra.mxu0 %v471
      %542 = vmatmul.f32.gmra.mxu0 %v525
      %v543 = vpop.f32.mrf.mxu0
      %v544 = vadd.f32 1e-05, %v543
      %545 = vdwg.mxu0
      %v546 = vrsqrt.pop %v544
      %v547 = vmul.f32 %v546, %v544
      %v548 = vmul.f32 %v547, %v546
      %v549 = vmul.f32 0.5, %v548
      %v550 = vsub.f32 1.5, %v549
      %v551 = vmul.f32 %v546, %v550
      %vm552 = vweird.f32 %v544
      %vm553 = vweird.f32 %v546
      %vm554 = vmor %vm552, %vm553
      %v555 = vsel %vm554, %v546, %v551
      %v556 = vperm.slane %v555, 0
      %v557 = vmul.f32 %v515, %v556
      %v558 = vmul.f32 %v516, %v556
      %v559 = vld [vmem:[%s3] sm:$0x1]
      %v561 = vperm.slane %v559, 0
      %v563 = vmul.f32 %v557, %v561
      %v564 = vmul.f32 %v558, %v561
      %v565 = vld [vmem:[%s4] sm:$0x1]
      %v567 = vperm.slane %v565, 0
      %v569 = vadd.f32 %v563, %v567
      %v570 = vadd.f32 %v564, %v567
      %v571 = vld [vmem:[%s325] sm:$0x1]
      %v572 = vadd.f32 %v571, 1.0
      %v574 = vperm.slane %v572, 0
      %v576 = vmul.f32 %v569, %v574
      %v577 = vmul.f32 %v570, %v574
      %v578 = vld [vmem:[%s328] sm:$0x1]
      %v580 = vperm.slane %v578, 0
      %v582 = vadd.f32 %v576, %v580
      %v583 = vadd.f32 %v577, %v580
      %v584 = vxor.u32 %v582, 2147483648
      %v585 = vxor.u32 %v583, 2147483648
      %v586 = vmul.f32 %v584, 1.442695
      %v587 = vpow.pop %v586
      %v588 = vmul.f32 %v585, 1.442695
      %v589 = vpow.pop %v588
      %v590 = vadd.f32 %v587, 1.0
      %v591 = vadd.f32 %v589, 1.0
      %v592 = vrcp.pop %v590
      %v593 = vmul.f32 %v590, %v592
      %v594 = vsub.f32 1.0, %v593
      %v595 = vmul.f32 %v592, %v594
      %v596 = vadd.f32 %v592, %v595
      %vm597 = vweird.f32 %v590
      %vm598 = vweird.f32 %v592
      %vm599 = vmor %vm597, %vm598
      %v600 = vsel %vm599, %v592, %v596
      %v601 = vand.u32 2147483647, %v590
      %vm602 = vcmp.eq.f32.partialorder %v601, 8.507059e+37
      %v603 = vand.u32 %v590, 2147483648
      %v604 = vor.u32 1.1754944e-38, %v603
      %v605 = vsel %vm602, %v604, %v600
      %v606 = vmul.f32 1.0, %v605
      %v607 = vrcp.pop %v591
      %v608 = vmul.f32 %v591, %v607
      %v609 = vsub.f32 1.0, %v608
      %v610 = vmul.f32 %v607, %v609
      %v611 = vadd.f32 %v607, %v610
      %vm612 = vweird.f32 %v591
      %vm613 = vweird.f32 %v607
      %vm614 = vmor %vm612, %vm613
      %v615 = vsel %vm614, %v607, %v611
      %v616 = vand.u32 2147483647, %v591
      %vm617 = vcmp.eq.f32.partialorder %v616, 8.507059e+37
      %v618 = vand.u32 %v591, 2147483648
      %v619 = vor.u32 1.1754944e-38, %v618
      %v620 = vsel %vm617, %v619, %v615
      %v621 = vmul.f32 1.0, %v620
      %v622 = vmul.f32 %v582, %v606
      %v623 = vmul.f32 %v583, %v621
      %624 = vst [vmem:[%s333] sm:$0xff] %v622
      %625 = vst [vmem:[%s333 + $0x8] sm:$0xff] %v623
      %p626 = scmp.lt.s32.totalorder %s19, 1
      %s627 = scalar_select %p626, %s19, 1
      %s628 = smul.addr %s627, 2
      %s629 = smul.addr %s628, 8
      %s630 = scalar_lea.vmem %s8, %s629
      // Predicated region
      $region53: #{block_forward.1} parent=51 // pred_check
        %p631 = pneg %p220
      $region54: #{block_forward.1} parent=51 // pred_check_branch
        %633 = sbr.rel (%p631) target = $region56
      $region55: #{block_forward.1} parent=51 // pred_region
        _
      $region56: #{block_forward.1} parent=51 // pred_fallthru
        _
    $region52: #{block_forward.1} parent=5 // pred_fallthru
      _
    %p634 = scmp.le.s32.totalorder 2, %s14
    // Predicated region
    $region57: #{block_forward.1} parent=5 // pred_check
      %p635 = pneg %p634
    $region58: #{block_forward.1} parent=5 // pred_check_branch
      %637 = sbr.rel (%p635) target = $region60
    $region59: #{block_forward.1} parent=5 // pred_region
      %s638 = ssub.s32 %s14, 2
      // Predicated region
      $region61: #{block_forward.1} parent=59 // pred_check
        %p639 = pneg %p226
      $region62: #{block_forward.1} parent=59 // pred_check_branch
        %641 = sbr.rel (%p639) target = $region64
      $region63: #{block_forward.1} parent=59 // pred_region
        %p642 = scmp.lt.s32.totalorder %s20, 1
        %s643 = scalar_select %p642, %s20, 1
        %s644 = smul.addr %s643, 2
        %s645 = smul.addr %s644, 8
        %s646 = scalar_lea.vmem %s8, %s645
      $region64: #{block_forward.1} parent=59 // pred_fallthru
        _
    $region60: #{block_forward.1} parent=5 // pred_fallthru
      _
  $region6: #{block_forward.1} parent=0 // loop_footer
    %s18 = sadd.s32 1, %s14
  $region7: #{block_forward.1} parent=0 // loop_footer_branch
    %13 = sbr.rel target = $region3
  $region8: #{block_forward.1} parent=0 // loop_exit
    _

</llo_original>
